<compile_context>
chip_gen: v5e
topology: v5e:2x2
jax: 0.10.0
libtpu: 0.0.40
codegen_flags: <defaults>
</compile_context>

<pallas_src>
import functools

import jax
import jax.numpy as jnp
from jax.experimental import pallas as pl
from jax.experimental.pallas import tpu as pltpu


def _round_up(v, m):
    return ((v + m - 1) // m) * m


# ---------------------------------------------------------------------------
# Kernels
# ---------------------------------------------------------------------------
def ncm_kernel_fullk(x_ref, pT_ref, xn_ref, b_ref, o_ref):
    """Single-K tile: o = x @ (2P)^T - ||x||^2 - (||p||^2 + b). Pure MXU + epilogue."""
    xp = jnp.dot(x_ref[...], pT_ref[...], preferred_element_type=jnp.float32)  # (tm, tn)
    o_ref[...] = (xp - xn_ref[...] - b_ref[...]).astype(o_ref.dtype)


def ncm_kernel_acc(x_ref, pT_ref, xn_ref, b_ref, o_ref, acc_ref):
    """K-accumulated variant for large indim. Hot loop is MXU + accumulate only."""
    k = pl.program_id(2)

    @pl.when(k == 0)
    def _():
        acc_ref[...] = jnp.zeros_like(acc_ref)

    acc_ref[...] += jnp.dot(x_ref[...], pT_ref[...], preferred_element_type=jnp.float32)

    @pl.when(k == pl.num_programs(2) - 1)
    def _():
        # xn_ref / b_ref are already float32; subtraction only in the epilogue.
        o_ref[...] = (acc_ref[...] - xn_ref[...] - b_ref[...]).astype(o_ref.dtype)


# ---------------------------------------------------------------------------
# One-time parameter preparation (per weight update, out of the hot path)
# ---------------------------------------------------------------------------
def prepare_ncm_params(weight, bias, *, max_k_tile=2048, tn_pref=512, matmul_dtype=None):
    """Returns (protos_T_pad, b_fused_pad, meta) ready for ncm_output_forward.

    protos_T_pad: (Kp, Np)  = zero-padded (2 * prototypes)^T  (factor 2 folded in)
    b_fused_pad:  (1, Np)   = bias + ||p||^2 per prototype, float32
    meta:         static ints {indim, outdim, tn, tk} for the forward call
    """
    assert max_k_tile % 128 == 0 and tn_pref % 128 == 0
    outdim, indim = weight.shape

    # torch semantics: prototypes = weight.transpose(0,1) row-major-reshaped to
    # (outdim, indim). This is NOT simply `weight`.
    protos = weight.T.reshape(outdim, indim)
    p2 = jnp.sum(protos.astype(jnp.float32) ** 2, axis=1)                 # (outdim,)
    b_fused = (bias.astype(jnp.float32) + p2).reshape(1, outdim)          # f32
    protos_T2 = 2.0 * protos.astype(jnp.float32).T                        # (indim, outdim)

    # Tile/padding choices (done once here, padding is zero => exact).
    Kp_min = _round_up(indim, 128)
    if Kp_min <= max_k_tile:
        tk, Kp = Kp_min, Kp_min          # single-K fused kernel
    else:
        tk = max_k_tile
        Kp = _round_up(indim, tk)        # K-accumulated kernel
    Np_min = _round_up(outdim, 128)
    if Np_min <= tn_pref:
        tn, Np = Np_min, Np_min
    else:
        tn = tn_pref
        Np = _round_up(outdim, tn)

    pdtype = matmul_dtype if matmul_dtype is not None else weight.dtype
    protos_T_pad = jnp.pad(protos_T2, ((0, Kp - indim), (0, Np - outdim))).astype(pdtype)
    b_fused_pad = jnp.pad(b_fused, ((0, 0), (0, Np - outdim)))
    meta = {"indim": int(indim), "outdim": int(outdim), "tn": int(tn), "tk": int(tk)}
    return protos_T_pad, b_fused_pad, meta


# ---------------------------------------------------------------------------
# Forward
# ---------------------------------------------------------------------------
@functools.partial(
    jax.jit, static_argnames=("indim", "outdim", "tn", "tk", "tm", "matmul_dtype")
)
def ncm_output_forward(x, protos_T_pad, b_fused_pad, *, indim, outdim, tn, tk,
                       tm=256, matmul_dtype=None):
    """x: (B, indim) -> (B, outdim) negative squared distances minus bias."""
    B = x.shape[0]
    Kp, Np = protos_T_pad.shape

    tm = min(tm, _round_up(B, 8))
    Bp = _round_up(B, tm)

    # ||x||^2 hoisted out of the kernel, computed on the UN-padded x (exact).
    row_norm = jnp.sum(x.astype(jnp.float32) ** 2, axis=-1, keepdims=True)   # (B, 1)

    # Only pad when actually needed (K zero-padding is load-bearing for the dot).
    x_p = x if (Bp == B and Kp == indim) else jnp.pad(x, ((0, Bp - B), (0, Kp - indim)))
    xn_p = row_norm if Bp == B else jnp.pad(row_norm, ((0, Bp - B), (0, 0)))
    if matmul_dtype is not None:
        x_p = x_p.astype(matmul_dtype)

    grid_k = Kp // tk

    # Raise the scoped VMEM limit only when the (double-buffered) tiles need it.
    xbytes = jnp.dtype(x_p.dtype).itemsize
    pbytes = jnp.dtype(protos_T_pad.dtype).itemsize
    obytes = jnp.dtype(x.dtype).itemsize
    footprint = 2 * (tm * tk * xbytes + tk * tn * pbytes + tm * tn * obytes) + tm * tn * 4
    vmem_limit = None if footprint < 16 * 1024 * 1024 else min(2 * footprint, 100 * 1024 * 1024)

    if grid_k == 1:
        out_p = pl.pallas_call(
            ncm_kernel_fullk,
            out_shape=jax.ShapeDtypeStruct((Bp, Np), x.dtype),
            grid_spec=pltpu.PrefetchScalarGridSpec(
                num_scalar_prefetch=0,
                grid=(Bp // tm, Np // tn),
                in_specs=[
                    pl.BlockSpec((tm, Kp), lambda i, j: (i, 0)),   # x tile (full K)
                    pl.BlockSpec((Kp, tn), lambda i, j: (0, j)),   # (2P)^T tile
                    pl.BlockSpec((tm, 1), lambda i, j: (i, 0)),    # ||x||^2
                    pl.BlockSpec((1, tn), lambda i, j: (0, j)),    # bias + ||p||^2
                ],
                out_specs=pl.BlockSpec((tm, tn), lambda i, j: (i, j)),
            ),
            compiler_params=pltpu.CompilerParams(
                dimension_semantics=("parallel", "parallel"),
                vmem_limit_bytes=vmem_limit,
            ),
        )(x_p, protos_T_pad, xn_p, b_fused_pad)
    else:
        out_p = pl.pallas_call(
            ncm_kernel_acc,
            out_shape=jax.ShapeDtypeStruct((Bp, Np), x.dtype),
            grid_spec=pltpu.PrefetchScalarGridSpec(
                num_scalar_prefetch=0,
                grid=(Bp // tm, Np // tn, grid_k),
                in_specs=[
                    pl.BlockSpec((tm, tk), lambda i, j, k: (i, k)),   # x tile
                    pl.BlockSpec((tk, tn), lambda i, j, k: (k, j)),   # (2P)^T tile
                    pl.BlockSpec((tm, 1), lambda i, j, k: (i, 0)),    # ||x||^2
                    pl.BlockSpec((1, tn), lambda i, j, k: (0, j)),    # bias + ||p||^2
                ],
                out_specs=pl.BlockSpec((tm, tn), lambda i, j, k: (i, j)),
                scratch_shapes=[pltpu.VMEM((tm, tn), jnp.float32)],
            ),
            compiler_params=pltpu.CompilerParams(
                dimension_semantics=("parallel", "parallel", "arbitrary"),
                vmem_limit_bytes=vmem_limit,
            ),
        )(x_p, protos_T_pad, xn_p, b_fused_pad)

    return out_p[:B, :outdim]


# ---------------------------------------------------------------------------
# Self-test
# ---------------------------------------------------------------------------
if __name__ == "__main__":
    key = jax.random.PRNGKey(0)
    kx, kw, kb = jax.random.split(key, 3)

    # Small shapes consistent with the module.
    B, indim, outdim = 2, 32, 8
    bound = 1.0 / (indim ** 0.5)  # mimic nn.Linear's uniform(-1/sqrt(indim), 1/sqrt(indim))
    weight = jax.random.uniform(kw, (outdim, indim), jnp.float32, -bound, bound)
    bias = jax.random.uniform(kb, (outdim,), jnp.float32, -bound, bound)
    x = jax.random.normal(kx, (B, indim), dtype=jnp.float32)

    # Brute-force squared-distance reference (plain JAX).
    protos = weight.T.reshape(outdim, indim)
    ref = -jnp.sum((x[:, None, :] - protos[None, :, :]) ** 2, axis=-1) - bias[None, :]

    # Path 1: single-K fused kernel (typical case).
    pT, bf, meta = prepare_ncm_params(weight, bias)
    out = jax.block_until_ready(ncm_output_forward(x, pT, bf, **meta))
    assert out.shape == (B, outdim)
    assert jnp.allclose(out, ref, rtol=1e-4, atol=1e-4), float(jnp.max(jnp.abs(out - ref)))

    # Path 2: force the K-accumulated kernel (small max_k_tile, indim > 128).
    indim2 = 300
    weight2 = jax.random.uniform(kw, (outdim, indim2), jnp.float32, -bound, bound)
    x2 = jax.random.normal(kx, (B, indim2), dtype=jnp.float32)
    pT2, bf2, meta2 = prepare_ncm_params(weight2, bias, max_k_tile=128)
    out2 = jax.block_until_ready(ncm_output_forward(x2, pT2, bf2, **meta2))
    protos2 = weight2.T.reshape(outdim, indim2)
    ref2 = -jnp.sum((x2[:, None, :] - protos2[None, :, :]) ** 2, axis=-1) - bias[None, :]
    assert out2.shape == (B, outdim)
    assert jnp.allclose(out2, ref2, rtol=1e-4, atol=1e-4), float(jnp.max(jnp.abs(out2 - ref2)))

    print("KERNEL_OK")
</pallas_src>

<mosaic_0001>
module attributes {stable_mosaic.version = 11 : i64} {
  func.func @ncm_kernel_fullk(%arg0: i32, %arg1: i32, %arg2: memref<8x128xf32, #tpu.memory_space<vmem>>, %arg3: memref<128x128xf32, #tpu.memory_space<vmem>>, %arg4: memref<8x1xf32, #tpu.memory_space<vmem>>, %arg5: memref<1x128xf32, #tpu.memory_space<vmem>>, %arg6: memref<8x128xf32, #tpu.memory_space<vmem>>) attributes {dimension_semantics = [#tpu.dimension_semantics<parallel>, #tpu.dimension_semantics<parallel>], iteration_bounds = array<i64: 1, 1>, scalar_prefetch = 0 : i64, scratch_operands = 0 : i64, tpu.core_type = #tpu.core_type<tc>, window_params = [{transform_indices = @transform_0, window_bounds = array<i64: 8, 128>}, {transform_indices = @transform_1, window_bounds = array<i64: 128, 128>}, {transform_indices = @transform_2, window_bounds = array<i64: 8, 1>}, {transform_indices = @transform_3, window_bounds = array<i64: 1, 128>}, {transform_indices = @transform_4, window_bounds = array<i64: 8, 128>}]} {
    %c0 = arith.constant 0 : index
    %c0_0 = arith.constant 0 : index
    %0 = vector.load %arg2[%c0, %c0_0] : memref<8x128xf32, #tpu.memory_space<vmem>>, vector<8x128xf32>
    %c0_1 = arith.constant 0 : index
    %c0_2 = arith.constant 0 : index
    %1 = vector.load %arg3[%c0_1, %c0_2] : memref<128x128xf32, #tpu.memory_space<vmem>>, vector<128x128xf32>
    %cst = arith.constant dense<0.000000e+00> : vector<8x128xf32>
    %2 = tpu.matmul %0, %1, %cst {dimension_numbers = #tpu.dot_dimension_numbers<[1], [0], [0], [1], [0, 0, 1, 1], [], []>} : vector<8x128xf32>, vector<128x128xf32>, vector<8x128xf32> -> vector<8x128xf32>
    %c0_3 = arith.constant 0 : index
    %c0_4 = arith.constant 0 : index
    %3 = vector.load %arg4[%c0_3, %c0_4] : memref<8x1xf32, #tpu.memory_space<vmem>>, vector<8x1xf32>
    %4 = vector.broadcast %3 : vector<8x1xf32> to vector<8x128xf32>
    %5 = arith.subf %2, %4 : vector<8x128xf32>
    %c0_5 = arith.constant 0 : index
    %c0_6 = arith.constant 0 : index
    %6 = vector.load %arg5[%c0_5, %c0_6] : memref<1x128xf32, #tpu.memory_space<vmem>>, vector<1x128xf32>
    %7 = vector.broadcast %6 : vector<1x128xf32> to vector<8x128xf32>
    %8 = arith.subf %5, %7 : vector<8x128xf32>
    %c0_7 = arith.constant 0 : index
    %c0_8 = arith.constant 0 : index
    %9 = vector.load %arg6[%c0_7, %c0_8] : memref<8x128xf32, #tpu.memory_space<vmem>>, vector<8x128xf32>
    tpu.vector_store %arg6[%c0_7, %c0_8], %8 {strides = array<i32>} : memref<8x128xf32, #tpu.memory_space<vmem>>, vector<8x128xf32>,
    return
  }
  func.func @transform_0(%arg0: i32, %arg1: i32) -> (i32, i32) {
    %c0_i32 = arith.constant 0 : i32
    %c0_i32_0 = arith.constant 0 : i32
    return %arg0, %c0_i32 : i32, i32
  }
  func.func @transform_1(%arg0: i32, %arg1: i32) -> (i32, i32) {
    %c0_i32 = arith.constant 0 : i32
    %c0_i32_0 = arith.constant 0 : i32
    return %c0_i32, %arg1 : i32, i32
  }
  func.func @transform_2(%arg0: i32, %arg1: i32) -> (i32, i32) {
    %c0_i32 = arith.constant 0 : i32
    %c0_i32_0 = arith.constant 0 : i32
    return %arg0, %c0_i32 : i32, i32
  }
  func.func @transform_3(%arg0: i32, %arg1: i32) -> (i32, i32) {
    %c0_i32 = arith.constant 0 : i32
    %c0_i32_0 = arith.constant 0 : i32
    return %c0_i32, %arg1 : i32, i32
  }
  func.func @transform_4(%arg0: i32, %arg1: i32) -> (i32, i32) {
    %c0_i32 = arith.constant 0 : i32
    return %arg0, %arg1 : i32, i32
  }
}

</mosaic_0001>

<llo_original>
// kernel: ncm_output_forward.1
$region0: #{ncm_output_forward.1}
  #allocation0 [shape = 'u32[]', space=smem, size = 0x4, offset = 0x4, fixed_abs, tag = 'smem constant byte address 0x4 - core index']
  #allocation1 [shape = 'u32[72,128]{1,0:T(1,128)}', space=vmem, size = 0x9000, scoped, tag = 'internal scratch']
  %s0 = inlined_call_operand.vmem [shape: f32[8,128], index: 0, kind: input, shape index: {}]
  %s1 = inlined_call_operand.hbm [shape: f32[128,128], index: 1, kind: input, shape index: {}]
  %s2 = inlined_call_operand.vmem [shape: f32[8,1], index: 2, kind: input, shape index: {}]
  %s3 = inlined_call_operand.vmem [shape: f32[1,128], index: 3, kind: input, shape index: {}]
  %s4 = inlined_call_operand.vmem [shape: f32[8,128], index: 4, kind: output, shape index: {}]
  %s5 = sld [smem:[#allocation0]]
  $region30: #{ncm_output_forward.1} parent=0
    _
  %s7 = ssub.s32 1, %s5
  %s8 = scalar_select 0, %s7, %s5
  $region1: #{ncm_output_forward.1} parent=0
    #allocation2 [shape = 'u8[65536]{0}', space=vmem, size = 0x10000, scoped, tag = 'input window, operand 1, single buffered']
    #allocation3 [shape = 's32[1]{0}', space=sflag, size = 0x4, scoped, tag = 'scoped memory for ncm_output_forward.1']
    %9 = vsyncpa [#allocation3], 0
    // Predicated region
    $region2: #{ncm_output_forward.1} parent=1 // pred_check
      _
    $region3: #{ncm_output_forward.1} parent=1 // pred_check_branch
      %11 = sbr.rel (0) target = $region5
    $region4: #{ncm_output_forward.1} parent=1 // pred_region
      _
    $region5: #{ncm_output_forward.1} parent=1 // pred_fallthru
      _
    // Predicated region
    $region6: #{ncm_output_forward.1} parent=1 // pred_check
      _
    $region7: #{ncm_output_forward.1} parent=1 // pred_check_branch
      %13 = sbr.rel (0) target = $region9
    $region8: #{ncm_output_forward.1} parent=1 // pred_region
      %15 = vsyncadd [#allocation3], 0
      %s16 = sshll.u32 %s1, 4
      %s17 = int_to_ptr.hbm [resolvable:$true] %s16
      %s18 = sshll.u32 [#allocation2], 4
      %s19 = int_to_ptr.vmem [resolvable:$true] %s18
      %24 = dma.hbm_to_vmem [thread:$0]  %s17, 2048, %s19, [#allocation3], 128, 128, 8
    $region9: #{ncm_output_forward.1} parent=1 // pred_fallthru
      _
    // Predicated region
    $region10: #{ncm_output_forward.1} parent=1 // pred_check
      _
    $region11: #{ncm_output_forward.1} parent=1 // pred_check_branch
      %26 = sbr.rel (0) target = $region13
    $region12: #{ncm_output_forward.1} parent=1 // pred_region
      _
    $region13: #{ncm_output_forward.1} parent=1 // pred_fallthru
      _
    // Predicated region
    $region14: #{ncm_output_forward.1} parent=1 // pred_check
      _
    $region15: #{ncm_output_forward.1} parent=1 // pred_check_branch
      %28 = sbr.rel (0) target = $region17
    $region16: #{ncm_output_forward.1} parent=1 // pred_region
      _
    $region17: #{ncm_output_forward.1} parent=1 // pred_fallthru
      _
    // Predicated region
    $region18: #{ncm_output_forward.1} parent=1 // pred_check
      _
    $region19: #{ncm_output_forward.1} parent=1 // pred_check_branch
      %30 = sbr.rel (0) target = $region21
    $region20: #{ncm_output_forward.1} parent=1 // pred_region
      %32 = dma.done [#allocation3], 2048
    $region21: #{ncm_output_forward.1} parent=1 // pred_fallthru
      _
    %v33 = vld [vmem:[%s0] sm:$0xff]
    %v34 = vld [vmem:[#allocation2] sm:$0xff]
    %v35 = vld [vmem:[#allocation2 + $0x8] sm:$0xff]
    %v36 = vld [vmem:[#allocation2 + $0x10] sm:$0xff]
    %v37 = vld [vmem:[#allocation2 + $0x18] sm:$0xff]
    %v38 = vld [vmem:[#allocation2 + $0x20] sm:$0xff]
    %v39 = vld [vmem:[#allocation2 + $0x28] sm:$0xff]
    %v40 = vld [vmem:[#allocation2 + $0x30] sm:$0xff]
    %v41 = vld [vmem:[#allocation2 + $0x38] sm:$0xff]
    %v42 = vld [vmem:[#allocation2 + $0x40] sm:$0xff]
    %v43 = vld [vmem:[#allocation2 + $0x48] sm:$0xff]
    %v44 = vld [vmem:[#allocation2 + $0x50] sm:$0xff]
    %v45 = vld [vmem:[#allocation2 + $0x58] sm:$0xff]
    %v46 = vld [vmem:[#allocation2 + $0x60] sm:$0xff]
    %v47 = vld [vmem:[#allocation2 + $0x68] sm:$0xff]
    %v48 = vld [vmem:[#allocation2 + $0x70] sm:$0xff]
    %v49 = vld [vmem:[#allocation2 + $0x78] sm:$0xff]
    %50 = vmatpush.msra.mxu0 %v49
    %51 = vmatpush.msra.mxu0 %v48
    %52 = vmatpush.msra.mxu0 %v47
    %53 = vmatpush.msra.mxu0 %v46
    %54 = vmatpush.msra.mxu0 %v45
    %55 = vmatpush.msra.mxu0 %v44
    %56 = vmatpush.msra.mxu0 %v43
    %57 = vmatpush.msra.mxu0 %v42
    %58 = vmatpush.msra.mxu0 %v41
    %59 = vmatpush.msra.mxu0 %v40
    %60 = vmatpush.msra.mxu0 %v39
    %61 = vmatpush.msra.mxu0 %v38
    %62 = vmatpush.msra.mxu0 %v37
    %63 = vmatpush.msra.mxu0 %v36
    %64 = vmatpush.msra.mxu0 %v35
    %65 = vmatpush.msra.mxu0 %v34
    %66 = vmatmul.f32.gmra.mxu0 %v33
    %v67 = vpop.f32.mrf.mxu0
    %v68 = vadd.f32 0.0, %v67
    %69 = vdwg.mxu0
    %v70 = vld [vmem:[%s2] sm:$0xff]
    %72 = vset.pattern.permute.xlu0 0
    %73 = vperm.xlu0 %72, %v70
    %v74 = vpop.permute.xlu0 %73
    %v76 = vsub.f32 %v68, %v74
    %v77 = vld [vmem:[%s3] sm:$0x1]
    %v79 = vperm.slane %v77, 0
    %v81 = vsub.f32 %v76, %v79
    %82 = vst [vmem:[%s4] sm:$0xff] %v81
    // Predicated region
    $region22: #{ncm_output_forward.1} parent=1 // pred_check
      _
    $region23: #{ncm_output_forward.1} parent=1 // pred_check_branch
      %84 = sbr.rel (0) target = $region25
    $region24: #{ncm_output_forward.1} parent=1 // pred_region
      _
    $region25: #{ncm_output_forward.1} parent=1 // pred_fallthru
      _
    // Predicated region
    $region26: #{ncm_output_forward.1} parent=1 // pred_check
      _
    $region27: #{ncm_output_forward.1} parent=1 // pred_check_branch
      %86 = sbr.rel (0) target = $region29
    $region28: #{ncm_output_forward.1} parent=1 // pred_region
      _
    $region29: #{ncm_output_forward.1} parent=1 // pred_fallthru
      _
    %87 = vsyncpa [#allocation3], 1

</llo_original>
